<compile_context>
chip_gen: v6e
topology: v6e:2x2x1
jax: 0.10.0
libtpu: 0.0.40
codegen_flags: <defaults>
</compile_context>

<pallas_src>
import functools

import jax
import jax.numpy as jnp
from jax.experimental import pallas as pl
from jax.experimental.pallas import tpu as pltpu


NEG_SLOPE = 0.01  # PyTorch nn.LeakyReLU default


def _leaky_relu(x):
    return jnp.where(x > 0, x, NEG_SLOPE * x)


def _round_up(x, m):
    return ((x + m - 1) // m) * m


def _largest_divisor(m_blocks, k_cap):
    """Largest k in [1, k_cap] that divides m_blocks."""
    k_cap = max(1, min(int(k_cap), int(m_blocks)))
    for k in range(k_cap, 0, -1):
        if m_blocks % k == 0:
            return k
    return 1


def _vmem_budget_bytes():
    """Per-generation usable VMEM budget (leave headroom for the compiler)."""
    cap = 64 << 20  # conservative fallback (v7x per-TC size)
    try:
        info = pltpu.get_tpu_info()
        cap = int(getattr(info, "vmem_capacity_bytes", cap))
    except Exception:
        pass
    # ~75% of physical, never above ~100 MiB even on 128 MiB parts.
    return min((cap * 3) // 4, 100 << 20)


def _resident_spec(shape):
    """VMEM-resident (constant index_map) param block; single-buffered."""
    index_map = lambda i: (0,) * len(shape)
    try:
        return pl.BlockSpec(shape, index_map, pipeline_mode=pl.Buffered(1))
    except Exception:  # older jax without pipeline_mode / Buffered
        return pl.BlockSpec(shape, index_map)


def ae_kernel(x_ref,
              w1_ref, b1_ref, w2_ref, b2_ref,
              w3_ref, b3_ref, w4_ref, b4_ref,
              enc_ref, dec_ref):
    # x_ref: (TB, input_dim) natural layout.  Transpose in VMEM (XLU) so the
    # matmul lane dim is the batch tile (multiple of 128 -> lane-dense).
    xT = x_ref[...].T                                             # (d, TB)

    # Encoder
    h1 = jnp.dot(w1_ref[...], xT, preferred_element_type=jnp.float32) + b1_ref[...]
    h1 = _leaky_relu(h1)                                          # (h0, TB)
    enc = jnp.dot(w2_ref[...], h1, preferred_element_type=jnp.float32) + b2_ref[...]
    enc = _leaky_relu(enc)                                        # (h1, TB)

    # Decoder
    h3 = jnp.dot(w3_ref[...], enc, preferred_element_type=jnp.float32) + b3_ref[...]
    h3 = _leaky_relu(h3)                                          # (h0, TB)
    dec = jnp.dot(w4_ref[...], h3, preferred_element_type=jnp.float32) + b4_ref[...]
    dec = _leaky_relu(dec)                                        # (d, TB)

    # Write back in natural (batch, features) layout.
    enc_ref[...] = enc.T.astype(enc_ref.dtype)
    dec_ref[...] = dec.T.astype(dec_ref.dtype)


@functools.partial(jax.jit, static_argnames=("tb",))
def ae_forward(x, params, *, tb=1024):
    """Fused autoencoder forward.

    x: (batch, input_dim) float32
    params: w1..w4 in PyTorch (out_features, in_features) layout, b1..b4 as
            (out_features, 1).
    returns: (encoded (batch, hidden1), decoded (batch, input_dim))
    """
    batch, input_dim = x.shape
    hidden0 = params["w1"].shape[0]
    hidden1 = params["w2"].shape[0]

    # --- batch tiling: pad only to the next multiple of 128 -----------------
    tb = max(128, (int(tb) // 128) * 128)       # guard: tb must be a 128-multiple
    batch_p = _round_up(batch, 128)
    if batch_p != batch:
        x = jnp.pad(x, ((0, batch_p - batch), (0, 0)))
    m_blocks = batch_p // 128

    k = _largest_divisor(m_blocks, tb // 128)   # tile divides padded batch
    tb_eff = 128 * k

    # --- footprint-driven tile selection under a per-generation budget ------
    f32 = 4
    param_bytes = sum(int(p.size) * f32 for p in params.values())

    def footprint(tbe):
        io_blocks = 2 * f32 * tbe * (2 * input_dim + hidden1)   # dbl-buf x/enc/dec
        live = f32 * tbe * (3 * input_dim + 2 * hidden0 + 3 * hidden1)
        return io_blocks + live + 2 * param_bytes + (2 << 20)

    budget = _vmem_budget_bytes()
    while tb_eff > 128 and footprint(tb_eff) > budget:
        k = _largest_divisor(m_blocks, k - 1)   # shrink the tile, not the limit
        tb_eff = 128 * k

    # Feed both v7x TensorCores: at least 2 grid steps when the batch allows.
    if batch_p // tb_eff == 1 and m_blocks >= 2:
        k = _largest_divisor(m_blocks, m_blocks // 2)
        tb_eff = 128 * k

    num_tiles = batch_p // tb_eff
    vmem_limit = int(min(max(footprint(tb_eff), 4 << 20), budget))

    # --- specs ---------------------------------------------------------------
    x_spec = pl.BlockSpec((tb_eff, input_dim), lambda i: (i, 0))
    enc_spec = pl.BlockSpec((tb_eff, hidden1), lambda i: (i, 0))
    dec_spec = pl.BlockSpec((tb_eff, input_dim), lambda i: (i, 0))

    in_specs = [
        x_spec,
        _resident_spec(params["w1"].shape), _resident_spec(params["b1"].shape),
        _resident_spec(params["w2"].shape), _resident_spec(params["b2"].shape),
        _resident_spec(params["w3"].shape), _resident_spec(params["b3"].shape),
        _resident_spec(params["w4"].shape), _resident_spec(params["b4"].shape),
    ]
    out_specs = (enc_spec, dec_spec)
    out_shapes = (
        jax.ShapeDtypeStruct((batch_p, hidden1), jnp.float32),
        jax.ShapeDtypeStruct((batch_p, input_dim), jnp.float32),
    )

    # --- cost estimate (cheap, mem-bound custom call) ------------------------
    flops = 2 * batch_p * (input_dim * hidden0 + hidden0 * hidden1
                           + hidden1 * hidden0 + hidden0 * input_dim)
    param_elems = sum(int(p.size) for p in params.values())
    bytes_accessed = f32 * (batch_p * (2 * input_dim + hidden1) + param_elems)
    cost = pl.CostEstimate(flops=int(flops), transcendentals=0,
                           bytes_accessed=int(bytes_accessed))

    encoded, decoded = pl.pallas_call(
        ae_kernel,
        out_shape=out_shapes,
        grid=(num_tiles,),
        in_specs=in_specs,
        out_specs=out_specs,
        compiler_params=pltpu.CompilerParams(
            dimension_semantics=("parallel",),
            vmem_limit_bytes=vmem_limit,
        ),
        cost_estimate=cost,
    )(
        x,
        params["w1"], params["b1"],
        params["w2"], params["b2"],
        params["w3"], params["b3"],
        params["w4"], params["b4"],
    )

    if batch_p != batch:
        encoded = encoded[:batch]
        decoded = decoded[:batch]
    return encoded, decoded


def init_params(key, input_dim, hidden_dims):
    """nn.Linear-style init; weights in PyTorch (out, in) layout, biases (out, 1)."""
    dims = [
        (hidden_dims[0], input_dim),       # encoder linear 1
        (hidden_dims[1], hidden_dims[0]),  # encoder linear 2
        (hidden_dims[0], hidden_dims[1]),  # decoder linear 1
        (input_dim, hidden_dims[0]),       # decoder linear 2
    ]
    params = {}
    for i, (fan_out, fan_in) in enumerate(dims, start=1):
        key, kw, kb = jax.random.split(key, 3)
        bound = 1.0 / jnp.sqrt(jnp.float32(fan_in))
        params[f"w{i}"] = jax.random.uniform(
            kw, (fan_out, fan_in), jnp.float32, -bound, bound)
        params[f"b{i}"] = jax.random.uniform(
            kb, (fan_out, 1), jnp.float32, -bound, bound)
    return params


def ae_reference(x, params):
    """Pure-JAX reference matching the PyTorch module's forward."""
    h = _leaky_relu(x @ params["w1"].T + params["b1"].T)
    enc = _leaky_relu(h @ params["w2"].T + params["b2"].T)
    h = _leaky_relu(enc @ params["w3"].T + params["b3"].T)
    dec = _leaky_relu(h @ params["w4"].T + params["b4"].T)
    return enc, dec


if __name__ == "__main__":
    key = jax.random.PRNGKey(0)

    input_dim = 64
    hidden_dims = [32, 16]

    key, kx1, kx2, kp = jax.random.split(key, 4)
    params = init_params(kp, input_dim, hidden_dims)

    # Case 1: tiny batch (single 128-row padded tile).
    x1 = jax.random.normal(kx1, (8, input_dim), jnp.float32)
    enc1, dec1 = jax.block_until_ready(ae_forward(x1, params))
    enc1_ref, dec1_ref = ae_reference(x1, params)
    assert enc1.shape == (8, hidden_dims[1])
    assert dec1.shape == (8, input_dim)
    assert jnp.allclose(enc1, enc1_ref, atol=1e-4, rtol=1e-3)
    assert jnp.allclose(dec1, dec1_ref, atol=1e-4, rtol=1e-3)

    # Case 2: awkward batch (200 -> padded to 256, two 128-row tiles).
    x2 = jax.random.normal(kx2, (200, input_dim), jnp.float32)
    enc2, dec2 = jax.block_until_ready(ae_forward(x2, params))
    enc2_ref, dec2_ref = ae_reference(x2, params)
    assert enc2.shape == (200, hidden_dims[1])
    assert dec2.shape == (200, input_dim)
    assert jnp.allclose(enc2, enc2_ref, atol=1e-4, rtol=1e-3)
    assert jnp.allclose(dec2, dec2_ref, atol=1e-4, rtol=1e-3)

    print("KERNEL_OK")
</pallas_src>

<mosaic_0001>
module attributes {stable_mosaic.version = 11 : i64} {
  func.func @ae_kernel(%arg0: i32, %arg1: memref<128x64xf32, #tpu.memory_space<vmem>>, %arg2: memref<32x64xf32, #tpu.memory_space<vmem>>, %arg3: memref<32x1xf32, #tpu.memory_space<vmem>>, %arg4: memref<16x32xf32, #tpu.memory_space<vmem>>, %arg5: memref<16x1xf32, #tpu.memory_space<vmem>>, %arg6: memref<32x16xf32, #tpu.memory_space<vmem>>, %arg7: memref<32x1xf32, #tpu.memory_space<vmem>>, %arg8: memref<64x32xf32, #tpu.memory_space<vmem>>, %arg9: memref<64x1xf32, #tpu.memory_space<vmem>>, %arg10: memref<128x16xf32, #tpu.memory_space<vmem>>, %arg11: memref<128x64xf32, #tpu.memory_space<vmem>>) attributes {dimension_semantics = [#tpu.dimension_semantics<parallel>], iteration_bounds = array<i64: 1>, scalar_prefetch = 0 : i64, scratch_operands = 0 : i64, tpu.core_type = #tpu.core_type<tc>, window_params = [{transform_indices = @transform_0, window_bounds = array<i64: 128, 64>}, {pipeline_mode = #tpu.pipeline_mode<synchronous>, transform_indices = @transform_1, window_bounds = array<i64: 32, 64>}, {pipeline_mode = #tpu.pipeline_mode<synchronous>, transform_indices = @transform_2, window_bounds = array<i64: 32, 1>}, {pipeline_mode = #tpu.pipeline_mode<synchronous>, transform_indices = @transform_3, window_bounds = array<i64: 16, 32>}, {pipeline_mode = #tpu.pipeline_mode<synchronous>, transform_indices = @transform_4, window_bounds = array<i64: 16, 1>}, {pipeline_mode = #tpu.pipeline_mode<synchronous>, transform_indices = @transform_5, window_bounds = array<i64: 32, 16>}, {pipeline_mode = #tpu.pipeline_mode<synchronous>, transform_indices = @transform_6, window_bounds = array<i64: 32, 1>}, {pipeline_mode = #tpu.pipeline_mode<synchronous>, transform_indices = @transform_7, window_bounds = array<i64: 64, 32>}, {pipeline_mode = #tpu.pipeline_mode<synchronous>, transform_indices = @transform_8, window_bounds = array<i64: 64, 1>}, {transform_indices = @transform_9, window_bounds = array<i64: 128, 16>}, {transform_indices = @transform_10, window_bounds = array<i64: 128, 64>}]} {
    %c0 = arith.constant 0 : index
    %c0_0 = arith.constant 0 : index
    %0 = vector.load %arg1[%c0, %c0_0] : memref<128x64xf32, #tpu.memory_space<vmem>>, vector<128x64xf32>
    %1 = tpu.transpose %0, [1, 0] : vector<128x64xf32> -> vector<64x128xf32>
    %c0_1 = arith.constant 0 : index
    %c0_2 = arith.constant 0 : index
    %2 = vector.load %arg2[%c0_1, %c0_2] : memref<32x64xf32, #tpu.memory_space<vmem>>, vector<32x64xf32>
    %cst = arith.constant dense<0.000000e+00> : vector<32x128xf32>
    %3 = tpu.matmul %2, %1, %cst {dimension_numbers = #tpu.dot_dimension_numbers<[1], [0], [0], [1], [0, 0, 1, 1], [], []>} : vector<32x64xf32>, vector<64x128xf32>, vector<32x128xf32> -> vector<32x128xf32>
    %c0_3 = arith.constant 0 : index
    %c0_4 = arith.constant 0 : index
    %4 = vector.load %arg3[%c0_3, %c0_4] : memref<32x1xf32, #tpu.memory_space<vmem>>, vector<32x1xf32>
    %5 = vector.broadcast %4 : vector<32x1xf32> to vector<32x128xf32>
    %6 = arith.addf %3, %5 : vector<32x128xf32>
    %cst_5 = arith.constant 0.000000e+00 : f32
    %7 = vector.broadcast %cst_5 : f32 to vector<32x128xf32>
    %8 = arith.cmpf ogt, %6, %7 : vector<32x128xf32>
    %cst_6 = arith.constant 0.00999999977 : f32
    %9 = vector.broadcast %cst_6 : f32 to vector<32x128xf32>
    %10 = arith.mulf %9, %6 : vector<32x128xf32>
    %11 = arith.select %8, %6, %10 : vector<32x128xi1>, vector<32x128xf32>
    %c0_7 = arith.constant 0 : index
    %c0_8 = arith.constant 0 : index
    %12 = vector.load %arg4[%c0_7, %c0_8] : memref<16x32xf32, #tpu.memory_space<vmem>>, vector<16x32xf32>
    %cst_9 = arith.constant dense<0.000000e+00> : vector<16x128xf32>
    %13 = tpu.matmul %12, %11, %cst_9 {dimension_numbers = #tpu.dot_dimension_numbers<[1], [0], [0], [1], [0, 0, 1, 1], [], []>} : vector<16x32xf32>, vector<32x128xf32>, vector<16x128xf32> -> vector<16x128xf32>
    %c0_10 = arith.constant 0 : index
    %c0_11 = arith.constant 0 : index
    %14 = vector.load %arg5[%c0_10, %c0_11] : memref<16x1xf32, #tpu.memory_space<vmem>>, vector<16x1xf32>
    %15 = vector.broadcast %14 : vector<16x1xf32> to vector<16x128xf32>
    %16 = arith.addf %13, %15 : vector<16x128xf32>
    %cst_12 = arith.constant 0.000000e+00 : f32
    %17 = vector.broadcast %cst_12 : f32 to vector<16x128xf32>
    %18 = arith.cmpf ogt, %16, %17 : vector<16x128xf32>
    %cst_13 = arith.constant 0.00999999977 : f32
    %19 = vector.broadcast %cst_13 : f32 to vector<16x128xf32>
    %20 = arith.mulf %19, %16 : vector<16x128xf32>
    %21 = arith.select %18, %16, %20 : vector<16x128xi1>, vector<16x128xf32>
    %c0_14 = arith.constant 0 : index
    %c0_15 = arith.constant 0 : index
    %22 = vector.load %arg6[%c0_14, %c0_15] : memref<32x16xf32, #tpu.memory_space<vmem>>, vector<32x16xf32>
    %cst_16 = arith.constant dense<0.000000e+00> : vector<32x128xf32>
    %23 = tpu.matmul %22, %21, %cst_16 {dimension_numbers = #tpu.dot_dimension_numbers<[1], [0], [0], [1], [0, 0, 1, 1], [], []>} : vector<32x16xf32>, vector<16x128xf32>, vector<32x128xf32> -> vector<32x128xf32>
    %c0_17 = arith.constant 0 : index
    %c0_18 = arith.constant 0 : index
    %24 = vector.load %arg7[%c0_17, %c0_18] : memref<32x1xf32, #tpu.memory_space<vmem>>, vector<32x1xf32>
    %25 = vector.broadcast %24 : vector<32x1xf32> to vector<32x128xf32>
    %26 = arith.addf %23, %25 : vector<32x128xf32>
    %cst_19 = arith.constant 0.000000e+00 : f32
    %27 = vector.broadcast %cst_19 : f32 to vector<32x128xf32>
    %28 = arith.cmpf ogt, %26, %27 : vector<32x128xf32>
    %cst_20 = arith.constant 0.00999999977 : f32
    %29 = vector.broadcast %cst_20 : f32 to vector<32x128xf32>
    %30 = arith.mulf %29, %26 : vector<32x128xf32>
    %31 = arith.select %28, %26, %30 : vector<32x128xi1>, vector<32x128xf32>
    %c0_21 = arith.constant 0 : index
    %c0_22 = arith.constant 0 : index
    %32 = vector.load %arg8[%c0_21, %c0_22] : memref<64x32xf32, #tpu.memory_space<vmem>>, vector<64x32xf32>
    %cst_23 = arith.constant dense<0.000000e+00> : vector<64x128xf32>
    %33 = tpu.matmul %32, %31, %cst_23 {dimension_numbers = #tpu.dot_dimension_numbers<[1], [0], [0], [1], [0, 0, 1, 1], [], []>} : vector<64x32xf32>, vector<32x128xf32>, vector<64x128xf32> -> vector<64x128xf32>
    %c0_24 = arith.constant 0 : index
    %c0_25 = arith.constant 0 : index
    %34 = vector.load %arg9[%c0_24, %c0_25] : memref<64x1xf32, #tpu.memory_space<vmem>>, vector<64x1xf32>
    %35 = vector.broadcast %34 : vector<64x1xf32> to vector<64x128xf32>
    %36 = arith.addf %33, %35 : vector<64x128xf32>
    %cst_26 = arith.constant 0.000000e+00 : f32
    %37 = vector.broadcast %cst_26 : f32 to vector<64x128xf32>
    %38 = arith.cmpf ogt, %36, %37 : vector<64x128xf32>
    %cst_27 = arith.constant 0.00999999977 : f32
    %39 = vector.broadcast %cst_27 : f32 to vector<64x128xf32>
    %40 = arith.mulf %39, %36 : vector<64x128xf32>
    %41 = arith.select %38, %36, %40 : vector<64x128xi1>, vector<64x128xf32>
    %42 = tpu.transpose %21, [1, 0] : vector<16x128xf32> -> vector<128x16xf32>
    %c0_28 = arith.constant 0 : index
    %c0_29 = arith.constant 0 : index
    %43 = vector.load %arg10[%c0_28, %c0_29] : memref<128x16xf32, #tpu.memory_space<vmem>>, vector<128x16xf32>
    tpu.vector_store %arg10[%c0_28, %c0_29], %42 {strides = array<i32>} : memref<128x16xf32, #tpu.memory_space<vmem>>, vector<128x16xf32>,
    %44 = tpu.transpose %41, [1, 0] : vector<64x128xf32> -> vector<128x64xf32>
    %c0_30 = arith.constant 0 : index
    %c0_31 = arith.constant 0 : index
    %45 = vector.load %arg11[%c0_30, %c0_31] : memref<128x64xf32, #tpu.memory_space<vmem>>, vector<128x64xf32>
    tpu.vector_store %arg11[%c0_30, %c0_31], %44 {strides = array<i32>} : memref<128x64xf32, #tpu.memory_space<vmem>>, vector<128x64xf32>,
    return
  }
  func.func @transform_0(%arg0: i32) -> (i32, i32) {
    %c0_i32 = arith.constant 0 : i32
    %c0_i32_0 = arith.constant 0 : i32
    return %arg0, %c0_i32 : i32, i32
  }
  func.func @transform_1(%arg0: i32) -> (i32, i32) {
    %c0_i32 = arith.constant 0 : i32
    %c0_i32_0 = arith.constant 0 : i32
    %c0_i32_1 = arith.constant 0 : i32
    return %c0_i32, %c0_i32_0 : i32, i32
  }
  func.func @transform_2(%arg0: i32) -> (i32, i32) {
    %c0_i32 = arith.constant 0 : i32
    %c0_i32_0 = arith.constant 0 : i32
    %c0_i32_1 = arith.constant 0 : i32
    return %c0_i32, %c0_i32_0 : i32, i32
  }
  func.func @transform_3(%arg0: i32) -> (i32, i32) {
    %c0_i32 = arith.constant 0 : i32
    %c0_i32_0 = arith.constant 0 : i32
    %c0_i32_1 = arith.constant 0 : i32
    return %c0_i32, %c0_i32_0 : i32, i32
  }
  func.func @transform_4(%arg0: i32) -> (i32, i32) {
    %c0_i32 = arith.constant 0 : i32
    %c0_i32_0 = arith.constant 0 : i32
    %c0_i32_1 = arith.constant 0 : i32
    return %c0_i32, %c0_i32_0 : i32, i32
  }
  func.func @transform_5(%arg0: i32) -> (i32, i32) {
    %c0_i32 = arith.constant 0 : i32
    %c0_i32_0 = arith.constant 0 : i32
    %c0_i32_1 = arith.constant 0 : i32
    return %c0_i32, %c0_i32_0 : i32, i32
  }
  func.func @transform_6(%arg0: i32) -> (i32, i32) {
    %c0_i32 = arith.constant 0 : i32
    %c0_i32_0 = arith.constant 0 : i32
    %c0_i32_1 = arith.constant 0 : i32
    return %c0_i32, %c0_i32_0 : i32, i32
  }
  func.func @transform_7(%arg0: i32) -> (i32, i32) {
    %c0_i32 = arith.constant 0 : i32
    %c0_i32_0 = arith.constant 0 : i32
    %c0_i32_1 = arith.constant 0 : i32
    return %c0_i32, %c0_i32_0 : i32, i32
  }
  func.func @transform_8(%arg0: i32) -> (i32, i32) {
    %c0_i32 = arith.constant 0 : i32
    %c0_i32_0 = arith.constant 0 : i32
    %c0_i32_1 = arith.constant 0 : i32
    return %c0_i32, %c0_i32_0 : i32, i32
  }
  func.func @transform_9(%arg0: i32) -> (i32, i32) {
    %c0_i32 = arith.constant 0 : i32
    %c0_i32_0 = arith.constant 0 : i32
    return %arg0, %c0_i32 : i32, i32
  }
  func.func @transform_10(%arg0: i32) -> (i32, i32) {
    %c0_i32 = arith.constant 0 : i32
    %c0_i32_0 = arith.constant 0 : i32
    return %arg0, %c0_i32 : i32, i32
  }
}

</mosaic_0001>

<llo_original>
// kernel: ae_forward.1
$region0: #{ae_forward.1}
  #allocation0 [shape = 'u32[]', space=smem, size = 0x4, offset = 0x4, fixed_abs, tag = 'smem constant byte address 0x4 - core index']
  #allocation1 [shape = 'u32[144,128]{1,0:T(1,128)}', space=vmem, size = 0x12000, scoped, tag = 'internal scratch']
  %s0 = inlined_call_operand.vmem [shape: f32[128,64], index: 0, kind: input, shape index: {}]
  %s1 = inlined_call_operand.vmem [shape: f32[32,64], index: 1, kind: input, shape index: {}]
  %s2 = inlined_call_operand.vmem [shape: f32[32,1], index: 2, kind: input, shape index: {}]
  %s3 = inlined_call_operand.vmem [shape: f32[16,32], index: 3, kind: input, shape index: {}]
  %s4 = inlined_call_operand.vmem [shape: f32[16,1], index: 4, kind: input, shape index: {}]
  %s5 = inlined_call_operand.vmem [shape: f32[32,16], index: 5, kind: input, shape index: {}]
  %s6 = inlined_call_operand.vmem [shape: f32[32,1], index: 6, kind: input, shape index: {}]
  %s7 = inlined_call_operand.vmem [shape: f32[64,32], index: 7, kind: input, shape index: {}]
  %s8 = inlined_call_operand.vmem [shape: f32[64,1], index: 8, kind: input, shape index: {}]
  %s9 = inlined_call_operand.vmem [shape: f32[128,16], index: 9, kind: output, shape index: {0}]
  %s10 = inlined_call_operand.vmem [shape: f32[128,64], index: 10, kind: output, shape index: {1}]
  %11 = xla_tuple %s9, %s10
  %s12 = sld [smem:[#allocation0]]
  $region54: #{ae_forward.1} parent=0
    _
  %s14 = ssub.s32 1, %s12
  %s15 = scalar_select 0, %s14, %s12
  // Predicated region
  $region2: #{ae_forward.1} parent=0 // pred_check
    _
  $region3: #{ae_forward.1} parent=0 // pred_check_branch
    %17 = sbr.rel (0) target = $region5
  $region4: #{ae_forward.1} parent=0 // pred_region
    _
  $region5: #{ae_forward.1} parent=0 // pred_fallthru
    _
  // Predicated region
  $region6: #{ae_forward.1} parent=0 // pred_check
    _
  $region7: #{ae_forward.1} parent=0 // pred_check_branch
    %19 = sbr.rel (0) target = $region9
  $region8: #{ae_forward.1} parent=0 // pred_region
    _
  $region9: #{ae_forward.1} parent=0 // pred_fallthru
    _
  // Predicated region
  $region10: #{ae_forward.1} parent=0 // pred_check
    _
  $region11: #{ae_forward.1} parent=0 // pred_check_branch
    %21 = sbr.rel (0) target = $region13
  $region12: #{ae_forward.1} parent=0 // pred_region
    _
  $region13: #{ae_forward.1} parent=0 // pred_fallthru
    _
  // Predicated region
  $region14: #{ae_forward.1} parent=0 // pred_check
    _
  $region15: #{ae_forward.1} parent=0 // pred_check_branch
    %23 = sbr.rel (0) target = $region17
  $region16: #{ae_forward.1} parent=0 // pred_region
    _
  $region17: #{ae_forward.1} parent=0 // pred_fallthru
    _
  // Predicated region
  $region18: #{ae_forward.1} parent=0 // pred_check
    _
  $region19: #{ae_forward.1} parent=0 // pred_check_branch
    %25 = sbr.rel (0) target = $region21
  $region20: #{ae_forward.1} parent=0 // pred_region
    _
  $region21: #{ae_forward.1} parent=0 // pred_fallthru
    _
  // Predicated region
  $region22: #{ae_forward.1} parent=0 // pred_check
    _
  $region23: #{ae_forward.1} parent=0 // pred_check_branch
    %27 = sbr.rel (0) target = $region25
  $region24: #{ae_forward.1} parent=0 // pred_region
    _
  $region25: #{ae_forward.1} parent=0 // pred_fallthru
    _
  // Predicated region
  $region26: #{ae_forward.1} parent=0 // pred_check
    _
  $region27: #{ae_forward.1} parent=0 // pred_check_branch
    %29 = sbr.rel (0) target = $region29
  $region28: #{ae_forward.1} parent=0 // pred_region
    _
  $region29: #{ae_forward.1} parent=0 // pred_fallthru
    _
  // Predicated region
  $region30: #{ae_forward.1} parent=0 // pred_check
    _
  $region31: #{ae_forward.1} parent=0 // pred_check_branch
    %31 = sbr.rel (0) target = $region33
  $region32: #{ae_forward.1} parent=0 // pred_region
    _
  $region33: #{ae_forward.1} parent=0 // pred_fallthru
    _
  // Predicated region
  $region34: #{ae_forward.1} parent=0 // pred_check
    _
  $region35: #{ae_forward.1} parent=0 // pred_check_branch
    %33 = sbr.rel (0) target = $region37
  $region36: #{ae_forward.1} parent=0 // pred_region
    _
  $region37: #{ae_forward.1} parent=0 // pred_fallthru
    _
  %v34 = vld [vmem:[%s0] sm:$0xff]
  %v35 = vld [vmem:[%s0 + $0x8] sm:$0xff]
  %v36 = vld [vmem:[%s0 + $0x10] sm:$0xff]
  %v37 = vld [vmem:[%s0 + $0x18] sm:$0xff]
  %v38 = vld [vmem:[%s0 + $0x20] sm:$0xff]
  %v39 = vld [vmem:[%s0 + $0x28] sm:$0xff]
  %v40 = vld [vmem:[%s0 + $0x30] sm:$0xff]
  %v41 = vld [vmem:[%s0 + $0x38] sm:$0xff]
  %v42 = vld [vmem:[%s0 + $0x40] sm:$0xff]
  %v43 = vld [vmem:[%s0 + $0x48] sm:$0xff]
  %v44 = vld [vmem:[%s0 + $0x50] sm:$0xff]
  %v45 = vld [vmem:[%s0 + $0x58] sm:$0xff]
  %v46 = vld [vmem:[%s0 + $0x60] sm:$0xff]
  %v47 = vld [vmem:[%s0 + $0x68] sm:$0xff]
  %v48 = vld [vmem:[%s0 + $0x70] sm:$0xff]
  %v49 = vld [vmem:[%s0 + $0x78] sm:$0xff]
  %v50 = vld [vmem:[%s1] sm:$0xff]
  %v51 = vld [vmem:[%s1 + $0x8] sm:$0xff]
  %v52 = vld [vmem:[%s1 + $0x10] sm:$0xff]
  %v53 = vld [vmem:[%s1 + $0x18] sm:$0xff]
  %v54 = vld [vmem:[%s2] sm:$0xff]
  %v55 = vld [vmem:[%s2 + $0x8] sm:$0xff]
  %v56 = vld [vmem:[%s2 + $0x10] sm:$0xff]
  %v57 = vld [vmem:[%s2 + $0x18] sm:$0xff]
  %59 = vset.pattern.permute.xlu0 0
  %60 = vperm.xlu0 %59, %v54
  %v61 = vpop.permute.xlu0 %60
  %64 = vset.pattern.permute.xlu0 0
  %65 = vperm.xlu0 %64, %v55
  %v66 = vpop.permute.xlu0 %65
  %69 = vset.pattern.permute.xlu0 0
  %70 = vperm.xlu0 %69, %v56
  %v71 = vpop.permute.xlu0 %70
  %74 = vset.pattern.permute.xlu0 0
  %75 = vperm.xlu0 %74, %v57
  %v76 = vpop.permute.xlu0 %75
  %vm78 = vcmask 523264
  %v80 = vsel %vm78, %v50, 0
  %v83 = vsel %vm78, %v51, 0
  %v86 = vsel %vm78, %v52, 0
  %v89 = vsel %vm78, %v53, 0
  %v92 = vsel %vm78, %v34, 0
  %v95 = vsel %vm78, %v35, 0
  %v98 = vsel %vm78, %v36, 0
  %v101 = vsel %vm78, %v37, 0
  %v104 = vsel %vm78, %v38, 0
  %v107 = vsel %vm78, %v39, 0
  %v110 = vsel %vm78, %v40, 0
  %v113 = vsel %vm78, %v41, 0
  %v116 = vsel %vm78, %v42, 0
  %v119 = vsel %vm78, %v43, 0
  %v122 = vsel %vm78, %v44, 0
  %v125 = vsel %vm78, %v45, 0
  %v128 = vsel %vm78, %v46, 0
  %v131 = vsel %vm78, %v47, 0
  %v134 = vsel %vm78, %v48, 0
  %v137 = vsel %vm78, %v49, 0
  %139 = vmatprep.subr.mxu0 0.0
  %140 = vmatpush1.xpose.msra.mxu0 %v137
  %141 = vmatprep.subr.mxu0 0.0
  %142 = vmatpush1.xpose.msra.mxu0 %v134
  %143 = vmatprep.subr.mxu0 0.0
  %144 = vmatpush1.xpose.msra.mxu0 %v131
  %145 = vmatprep.subr.mxu0 0.0
  %146 = vmatpush1.xpose.msra.mxu0 %v128
  %147 = vmatprep.subr.mxu0 0.0
  %148 = vmatpush1.xpose.msra.mxu0 %v125
  %149 = vmatprep.subr.mxu0 0.0
  %150 = vmatpush1.xpose.msra.mxu0 %v122
  %151 = vmatprep.subr.mxu0 0.0
  %152 = vmatpush1.xpose.msra.mxu0 %v119
  %153 = vmatprep.subr.mxu0 0.0
  %154 = vmatpush1.xpose.msra.mxu0 %v116
  %155 = vmatprep.subr.mxu0 0.0
  %156 = vmatpush1.xpose.msra.mxu0 %v113
  %157 = vmatprep.subr.mxu0 0.0
  %158 = vmatpush1.xpose.msra.mxu0 %v110
  %159 = vmatprep.subr.mxu0 0.0
  %160 = vmatpush1.xpose.msra.mxu0 %v107
  %161 = vmatprep.subr.mxu0 0.0
  %162 = vmatpush1.xpose.msra.mxu0 %v104
  %163 = vmatprep.subr.mxu0 0.0
  %164 = vmatpush1.xpose.msra.mxu0 %v101
  %165 = vmatprep.subr.mxu0 0.0
  %166 = vmatpush1.xpose.msra.mxu0 %v98
  %167 = vmatprep.subr.mxu0 0.0
  %168 = vmatpush1.xpose.msra.mxu0 %v95
  %169 = vmatprep.subr.mxu0 0.0
  %170 = vmatpush1.xpose.msra.mxu0 %v92
  %171 = vmatprep.subr.mxu0 0.0
  %172 = vmatpush2.xpose.msra.mxu0 0.0
  %173 = vmatprep.subr.mxu0 0.0
  %174 = vmatpush2.xpose.msra.mxu0 0.0
  %175 = vmatprep.subr.mxu0 0.0
  %176 = vmatpush2.xpose.msra.mxu0 0.0
  %177 = vmatprep.subr.mxu0 0.0
  %178 = vmatpush2.xpose.msra.mxu0 0.0
  %179 = vmatprep.subr.mxu0 0.0
  %180 = vmatpush2.xpose.msra.mxu0 0.0
  %181 = vmatprep.subr.mxu0 0.0
  %182 = vmatpush2.xpose.msra.mxu0 0.0
  %183 = vmatprep.subr.mxu0 0.0
  %184 = vmatpush2.xpose.msra.mxu0 0.0
  %185 = vmatprep.subr.mxu0 0.0
  %186 = vmatpush2.xpose.msra.mxu0 0.0
  %187 = vmatprep.subr.mxu0 0.0
  %188 = vmatpush2.xpose.msra.mxu0 0.0
  %189 = vmatprep.subr.mxu0 0.0
  %190 = vmatpush2.xpose.msra.mxu0 0.0
  %191 = vmatprep.subr.mxu0 0.0
  %192 = vmatpush2.xpose.msra.mxu0 0.0
  %193 = vmatprep.subr.mxu0 0.0
  %194 = vmatpush2.xpose.msra.mxu0 0.0
  %195 = vmatprep.subr.mxu0 0.0
  %196 = vmatpush2.xpose.msra.mxu0 0.0
  %197 = vmatprep.subr.mxu0 0.0
  %198 = vmatpush2.xpose.msra.mxu0 0.0
  %199 = vmatprep.subr.mxu0 0.0
  %200 = vmatpush2.xpose.msra.mxu0 0.0
  %201 = vmatprep.subr.mxu0 0.0
  %202 = vmatpush2.xpose.msra.mxu0 0.0
  %203 = vmatprep.mubr.f32.mxu0 0.0
  %204 = vmatmul.mubr.f32.gmra.mxu0 %v80
  %v205 = vpop.f32.mrf.mxu0
  %v206 = vadd.f32 %v61, %v205
  %v207 = vpop.f32.mrf.mxu0
  %208 = vmatprep.mubr.f32.mxu0 0.0
  %209 = vmatmul.mubr.f32.gmra.mxu0 %v83
  %v210 = vpop.f32.mrf.mxu0
  %v211 = vadd.f32 %v66, %v210
  %v212 = vpop.f32.mrf.mxu0
  %213 = vmatprep.mubr.f32.mxu0 0.0
  %214 = vmatmul.mubr.f32.gmra.mxu0 %v86
  %v215 = vpop.f32.mrf.mxu0
  %v216 = vadd.f32 %v71, %v215
  %v217 = vpop.f32.mrf.mxu0
  %218 = vmatprep.mubr.f32.mxu0 0.0
  %219 = vmatmul.mubr.f32.gmra.mxu0 %v89
  %v220 = vpop.f32.mrf.mxu0
  %v221 = vadd.f32 %v76, %v220
  %v222 = vpop.f32.mrf.mxu0
  %223 = vdwg.mxu0
  %vm224 = vcmp.gt.f32.partialorder %v206, 0.0
  %vm225 = vcmp.gt.f32.partialorder %v211, 0.0
  %vm226 = vcmp.gt.f32.partialorder %v216, 0.0
  %vm227 = vcmp.gt.f32.partialorder %v221, 0.0
  %v228 = vmul.f32 %v206, 0.01
  %v229 = vmul.f32 %v211, 0.01
  %v230 = vmul.f32 %v216, 0.01
  %v231 = vmul.f32 %v221, 0.01
  %v232 = vsel %vm224, %v206, %v228
  %v233 = vsel %vm225, %v211, %v229
  %v234 = vsel %vm226, %v216, %v230
  %v235 = vsel %vm227, %v221, %v231
  %v236 = vld [vmem:[%s3] sm:$0xff]
  %v237 = vld [vmem:[%s3 + $0x8] sm:$0xff]
  %v238 = vld [vmem:[%s4] sm:$0xff]
  %v239 = vld [vmem:[%s4 + $0x8] sm:$0xff]
  %241 = vset.pattern.permute.xlu0 0
  %242 = vperm.xlu0 %241, %v238
  %v243 = vpop.permute.xlu0 %242
  %246 = vset.pattern.permute.xlu0 0
  %247 = vperm.xlu0 %246, %v239
  %v248 = vpop.permute.xlu0 %247
  %vm250 = vcmask 261120
  %v252 = vsel %vm250, %v236, 0
  %v255 = vsel %vm250, %v237, 0
  %257 = vmatprep.subr.mxu0 0.0
  %258 = vmatpush1.msra.mxu0 0.0
  %259 = vmatprep.subr.mxu0 0.0
  %260 = vmatpush1.msra.mxu0 0.0
  %261 = vmatprep.subr.mxu0 0.0
  %262 = vmatpush1.msra.mxu0 0.0
  %263 = vmatprep.subr.mxu0 0.0
  %264 = vmatpush1.msra.mxu0 0.0
  %265 = vmatprep.subr.mxu0 0.0
  %266 = vmatpush1.msra.mxu0 0.0
  %267 = vmatprep.subr.mxu0 0.0
  %268 = vmatpush1.msra.mxu0 0.0
  %269 = vmatprep.subr.mxu0 0.0
  %270 = vmatpush1.msra.mxu0 0.0
  %271 = vmatprep.subr.mxu0 0.0
  %272 = vmatpush1.msra.mxu0 0.0
  %273 = vmatprep.subr.mxu0 0.0
  %274 = vmatpush1.msra.mxu0 0.0
  %275 = vmatprep.subr.mxu0 0.0
  %276 = vmatpush1.msra.mxu0 0.0
  %277 = vmatprep.subr.mxu0 0.0
  %278 = vmatpush1.msra.mxu0 0.0
  %279 = vmatprep.subr.mxu0 0.0
  %280 = vmatpush1.msra.mxu0 0.0
  %281 = vmatprep.subr.mxu0 0.0
  %282 = vmatpush1.msra.mxu0 %v235
  %283 = vmatprep.subr.mxu0 0.0
  %284 = vmatpush1.msra.mxu0 %v234
  %285 = vmatprep.subr.mxu0 0.0
  %286 = vmatpush1.msra.mxu0 %v233
  %287 = vmatprep.subr.mxu0 0.0
  %288 = vmatpush1.msra.mxu0 %v232
  %289 = vmatprep.subr.mxu0 0.0
  %290 = vmatpush2.msra.mxu0 0.0
  %291 = vmatprep.subr.mxu0 0.0
  %292 = vmatpush2.msra.mxu0 0.0
  %293 = vmatprep.subr.mxu0 0.0
  %294 = vmatpush2.msra.mxu0 0.0
  %295 = vmatprep.subr.mxu0 0.0
  %296 = vmatpush2.msra.mxu0 0.0
  %297 = vmatprep.subr.mxu0 0.0
  %298 = vmatpush2.msra.mxu0 0.0
  %299 = vmatprep.subr.mxu0 0.0
  %300 = vmatpush2.msra.mxu0 0.0
  %301 = vmatprep.subr.mxu0 0.0
  %302 = vmatpush2.msra.mxu0 0.0
  %303 = vmatprep.subr.mxu0 0.0
  %304 = vmatpush2.msra.mxu0 0.0
  %305 = vmatprep.subr.mxu0 0.0
  %306 = vmatpush2.msra.mxu0 0.0
  %307 = vmatprep.subr.mxu0 0.0
  %308 = vmatpush2.msra.mxu0 0.0
  %309 = vmatprep.subr.mxu0 0.0
  %310 = vmatpush2.msra.mxu0 0.0
  %311 = vmatprep.subr.mxu0 0.0
  %312 = vmatpush2.msra.mxu0 0.0
  %313 = vmatprep.subr.mxu0 0.0
  %314 = vmatpush2.msra.mxu0 0.0
  %315 = vmatprep.subr.mxu0 0.0
  %316 = vmatpush2.msra.mxu0 0.0
  %317 = vmatprep.subr.mxu0 0.0
  %318 = vmatpush2.msra.mxu0 0.0
  %319 = vmatprep.subr.mxu0 0.0
  %320 = vmatpush2.msra.mxu0 0.0
  %321 = vmatprep.mubr.f32.mxu0 0.0
  %322 = vmatmul.mubr.f32.gmra.mxu0 %v252
  %v323 = vpop.f32.mrf.mxu0
  %v324 = vadd.f32 %v243, %v323
  %v325 = vpop.f32.mrf.mxu0
  %326 = vmatprep.mubr.f32.mxu0 0.0
  %327 = vmatmul.mubr.f32.gmra.mxu0 %v255
  %v328 = vpop.f32.mrf.mxu0
  %v329 = vadd.f32 %v248, %v328
  %v330 = vpop.f32.mrf.mxu0
  %331 = vdwg.mxu0
  %vm332 = vcmp.gt.f32.partialorder %v324, 0.0
  %vm333 = vcmp.gt.f32.partialorder %v329, 0.0
  %v334 = vmul.f32 %v324, 0.01
  %v335 = vmul.f32 %v329, 0.01
  %v336 = vsel %vm332, %v324, %v334
  %v337 = vsel %vm333, %v329, %v335
  %v338 = vld [vmem:[%s5] sm:$0xff]
  %v339 = vld [vmem:[%s5 + $0x8] sm:$0xff]
  %v340 = vld [vmem:[%s5 + $0x10] sm:$0xff]
  %v341 = vld [vmem:[%s5 + $0x18] sm:$0xff]
  %v342 = vld [vmem:[%s6] sm:$0xff]
  %v343 = vld [vmem:[%s6 + $0x8] sm:$0xff]
  %v344 = vld [vmem:[%s6 + $0x10] sm:$0xff]
  %v345 = vld [vmem:[%s6 + $0x18] sm:$0xff]
  %347 = vset.pattern.permute.xlu0 0
  %348 = vperm.xlu0 %347, %v342
  %v349 = vpop.permute.xlu0 %348
  %352 = vset.pattern.permute.xlu0 0
  %353 = vperm.xlu0 %352, %v343
  %v354 = vpop.permute.xlu0 %353
  %357 = vset.pattern.permute.xlu0 0
  %358 = vperm.xlu0 %357, %v344
  %v359 = vpop.permute.xlu0 %358
  %362 = vset.pattern.permute.xlu0 0
  %363 = vperm.xlu0 %362, %v345
  %v364 = vpop.permute.xlu0 %363
  %vm366 = vcmask 130048
  %v368 = vsel %vm366, %v338, 0
  %v371 = vsel %vm366, %v339, 0
  %v374 = vsel %vm366, %v340, 0
  %v377 = vsel %vm366, %v341, 0
  %379 = vmatprep.subr.mxu0 0.0
  %380 = vmatpush1.msra.mxu0 0.0
  %381 = vmatprep.subr.mxu0 0.0
  %382 = vmatpush1.msra.mxu0 0.0
  %383 = vmatprep.subr.mxu0 0.0
  %384 = vmatpush1.msra.mxu0 0.0
  %385 = vmatprep.subr.mxu0 0.0
  %386 = vmatpush1.msra.mxu0 0.0
  %387 = vmatprep.subr.mxu0 0.0
  %388 = vmatpush1.msra.mxu0 0.0
  %389 = vmatprep.subr.mxu0 0.0
  %390 = vmatpush1.msra.mxu0 0.0
  %391 = vmatprep.subr.mxu0 0.0
  %392 = vmatpush1.msra.mxu0 0.0
  %393 = vmatprep.subr.mxu0 0.0
  %394 = vmatpush1.msra.mxu0 0.0
  %395 = vmatprep.subr.mxu0 0.0
  %396 = vmatpush1.msra.mxu0 0.0
  %397 = vmatprep.subr.mxu0 0.0
  %398 = vmatpush1.msra.mxu0 0.0
  %399 = vmatprep.subr.mxu0 0.0
  %400 = vmatpush1.msra.mxu0 0.0
  %401 = vmatprep.subr.mxu0 0.0
  %402 = vmatpush1.msra.mxu0 0.0
  %403 = vmatprep.subr.mxu0 0.0
  %404 = vmatpush1.msra.mxu0 0.0
  %405 = vmatprep.subr.mxu0 0.0
  %406 = vmatpush1.msra.mxu0 0.0
  %407 = vmatprep.subr.mxu0 0.0
  %408 = vmatpush1.msra.mxu0 %v337
  %409 = vmatprep.subr.mxu0 0.0
  %410 = vmatpush1.msra.mxu0 %v336
  %411 = vmatprep.subr.mxu0 0.0
  %412 = vmatpush2.msra.mxu0 0.0
  %413 = vmatprep.subr.mxu0 0.0
  %414 = vmatpush2.msra.mxu0 0.0
  %415 = vmatprep.subr.mxu0 0.0
  %416 = vmatpush2.msra.mxu0 0.0
  %417 = vmatprep.subr.mxu0 0.0
  %418 = vmatpush2.msra.mxu0 0.0
  %419 = vmatprep.subr.mxu0 0.0
  %420 = vmatpush2.msra.mxu0 0.0
  %421 = vmatprep.subr.mxu0 0.0
  %422 = vmatpush2.msra.mxu0 0.0
  %423 = vmatprep.subr.mxu0 0.0
  %424 = vmatpush2.msra.mxu0 0.0
  %425 = vmatprep.subr.mxu0 0.0
  %426 = vmatpush2.msra.mxu0 0.0
  %427 = vmatprep.subr.mxu0 0.0
  %428 = vmatpush2.msra.mxu0 0.0
  %429 = vmatprep.subr.mxu0 0.0
  %430 = vmatpush2.msra.mxu0 0.0
  %431 = vmatprep.subr.mxu0 0.0
  %432 = vmatpush2.msra.mxu0 0.0
  %433 = vmatprep.subr.mxu0 0.0
  %434 = vmatpush2.msra.mxu0 0.0
  %435 = vmatprep.subr.mxu0 0.0
  %436 = vmatpush2.msra.mxu0 0.0
  %437 = vmatprep.subr.mxu0 0.0
  %438 = vmatpush2.msra.mxu0 0.0
  %439 = vmatprep.subr.mxu0 0.0
  %440 = vmatpush2.msra.mxu0 0.0
  %441 = vmatprep.subr.mxu0 0.0
  %442 = vmatpush2.msra.mxu0 0.0
  %443 = vmatprep.mubr.f32.mxu0 0.0
  %444 = vmatmul.mubr.f32.gmra.mxu0 %v368
  %v445 = vpop.f32.mrf.mxu0
  %v446 = vadd.f32 %v349, %v445
  %v447 = vpop.f32.mrf.mxu0
  %448 = vmatprep.mubr.f32.mxu0 0.0
  %449 = vmatmul.mubr.f32.gmra.mxu0 %v371
  %v450 = vpop.f32.mrf.mxu0
  %v451 = vadd.f32 %v354, %v450
  %v452 = vpop.f32.mrf.mxu0
  %453 = vmatprep.mubr.f32.mxu0 0.0
  %454 = vmatmul.mubr.f32.gmra.mxu0 %v374
  %v455 = vpop.f32.mrf.mxu0
  %v456 = vadd.f32 %v359, %v455
  %v457 = vpop.f32.mrf.mxu0
  %458 = vmatprep.mubr.f32.mxu0 0.0
  %459 = vmatmul.mubr.f32.gmra.mxu0 %v377
  %v460 = vpop.f32.mrf.mxu0
  %v461 = vadd.f32 %v364, %v460
  %v462 = vpop.f32.mrf.mxu0
  %463 = vdwg.mxu0
  %vm464 = vcmp.gt.f32.partialorder %v446, 0.0
  %vm465 = vcmp.gt.f32.partialorder %v451, 0.0
  %vm466 = vcmp.gt.f32.partialorder %v456, 0.0
  %vm467 = vcmp.gt.f32.partialorder %v461, 0.0
  %v468 = vmul.f32 %v446, 0.01
  %v469 = vmul.f32 %v451, 0.01
  %v470 = vmul.f32 %v456, 0.01
  %v471 = vmul.f32 %v461, 0.01
  %v472 = vsel %vm464, %v446, %v468
  %v473 = vsel %vm465, %v451, %v469
  %v474 = vsel %vm466, %v456, %v470
  %v475 = vsel %vm467, %v461, %v471
  %v476 = vld [vmem:[%s7] sm:$0xff]
  %v477 = vld [vmem:[%s7 + $0x8] sm:$0xff]
  %v478 = vld [vmem:[%s7 + $0x10] sm:$0xff]
  %v479 = vld [vmem:[%s7 + $0x18] sm:$0xff]
  %v480 = vld [vmem:[%s7 + $0x20] sm:$0xff]
  %v481 = vld [vmem:[%s7 + $0x28] sm:$0xff]
  %v482 = vld [vmem:[%s7 + $0x30] sm:$0xff]
  %v483 = vld [vmem:[%s7 + $0x38] sm:$0xff]
  %v484 = vld [vmem:[%s8] sm:$0xff]
  %v485 = vld [vmem:[%s8 + $0x8] sm:$0xff]
  %v486 = vld [vmem:[%s8 + $0x10] sm:$0xff]
  %v487 = vld [vmem:[%s8 + $0x18] sm:$0xff]
  %v488 = vld [vmem:[%s8 + $0x20] sm:$0xff]
  %v489 = vld [vmem:[%s8 + $0x28] sm:$0xff]
  %v490 = vld [vmem:[%s8 + $0x30] sm:$0xff]
  %v491 = vld [vmem:[%s8 + $0x38] sm:$0xff]
  %493 = vset.pattern.permute.xlu0 0
  %494 = vperm.xlu0 %493, %v484
  %v495 = vpop.permute.xlu0 %494
  %498 = vset.pattern.permute.xlu0 0
  %499 = vperm.xlu0 %498, %v485
  %v500 = vpop.permute.xlu0 %499
  %503 = vset.pattern.permute.xlu0 0
  %504 = vperm.xlu0 %503, %v486
  %v505 = vpop.permute.xlu0 %504
  %508 = vset.pattern.permute.xlu0 0
  %509 = vperm.xlu0 %508, %v487
  %v510 = vpop.permute.xlu0 %509
  %513 = vset.pattern.permute.xlu0 0
  %514 = vperm.xlu0 %513, %v488
  %v515 = vpop.permute.xlu0 %514
  %518 = vset.pattern.permute.xlu0 0
  %519 = vperm.xlu0 %518, %v489
  %v520 = vpop.permute.xlu0 %519
  %523 = vset.pattern.permute.xlu0 0
  %524 = vperm.xlu0 %523, %v490
  %v525 = vpop.permute.xlu0 %524
  %528 = vset.pattern.permute.xlu0 0
  %529 = vperm.xlu0 %528, %v491
  %v530 = vpop.permute.xlu0 %529
  %v533 = vsel %vm250, %v476, 0
  %v536 = vsel %vm250, %v477, 0
  %v539 = vsel %vm250, %v478, 0
  %v542 = vsel %vm250, %v479, 0
  %v545 = vsel %vm250, %v480, 0
  %v548 = vsel %vm250, %v481, 0
  %v551 = vsel %vm250, %v482, 0
  %v554 = vsel %vm250, %v483, 0
  %556 = vmatprep.subr.mxu0 0.0
  %557 = vmatpush1.msra.mxu0 0.0
  %558 = vmatprep.subr.mxu0 0.0
  %559 = vmatpush1.msra.mxu0 0.0
  %560 = vmatprep.subr.mxu0 0.0
  %561 = vmatpush1.msra.mxu0 0.0
  %562 = vmatprep.subr.mxu0 0.0
  %563 = vmatpush1.msra.mxu0 0.0
  %564 = vmatprep.subr.mxu0 0.0
  %565 = vmatpush1.msra.mxu0 0.0
  %566 = vmatprep.subr.mxu0 0.0
  %567 = vmatpush1.msra.mxu0 0.0
  %568 = vmatprep.subr.mxu0 0.0
  %569 = vmatpush1.msra.mxu0 0.0
  %570 = vmatprep.subr.mxu0 0.0
  %571 = vmatpush1.msra.mxu0 0.0
  %572 = vmatprep.subr.mxu0 0.0
  %573 = vmatpush1.msra.mxu0 0.0
  %574 = vmatprep.subr.mxu0 0.0
  %575 = vmatpush1.msra.mxu0 0.0
  %576 = vmatprep.subr.mxu0 0.0
  %577 = vmatpush1.msra.mxu0 0.0
  %578 = vmatprep.subr.mxu0 0.0
  %579 = vmatpush1.msra.mxu0 0.0
  %580 = vmatprep.subr.mxu0 0.0
  %581 = vmatpush1.msra.mxu0 %v475
  %582 = vmatprep.subr.mxu0 0.0
  %583 = vmatpush1.msra.mxu0 %v474
  %584 = vmatprep.subr.mxu0 0.0
  %585 = vmatpush1.msra.mxu0 %v473
  %586 = vmatprep.subr.mxu0 0.0
  %587 = vmatpush1.msra.mxu0 %v472
  %588 = vmatprep.subr.mxu0 0.0
  %589 = vmatpush2.msra.mxu0 0.0
  %590 = vmatprep.subr.mxu0 0.0
  %591 = vmatpush2.msra.mxu0 0.0
  %592 = vmatprep.subr.mxu0 0.0
  %593 = vmatpush2.msra.mxu0 0.0
  %594 = vmatprep.subr.mxu0 0.0
  %595 = vmatpush2.msra.mxu0 0.0
  %596 = vmatprep.subr.mxu0 0.0
  %597 = vmatpush2.msra.mxu0 0.0
  %598 = vmatprep.subr.mxu0 0.0
  %599 = vmatpush2.msra.mxu0 0.0
  %600 = vmatprep.subr.mxu0 0.0
  %601 = vmatpush2.msra.mxu0 0.0
  %602 = vmatprep.subr.mxu0 0.0
  %603 = vmatpush2.msra.mxu0 0.0
  %604 = vmatprep.subr.mxu0 0.0
  %605 = vmatpush2.msra.mxu0 0.0
  %606 = vmatprep.subr.mxu0 0.0
  %607 = vmatpush2.msra.mxu0 0.0
  %608 = vmatprep.subr.mxu0 0.0
  %609 = vmatpush2.msra.mxu0 0.0
  %610 = vmatprep.subr.mxu0 0.0
  %611 = vmatpush2.msra.mxu0 0.0
  %612 = vmatprep.subr.mxu0 0.0
  %613 = vmatpush2.msra.mxu0 0.0
  %614 = vmatprep.subr.mxu0 0.0
  %615 = vmatpush2.msra.mxu0 0.0
  %616 = vmatprep.subr.mxu0 0.0
  %617 = vmatpush2.msra.mxu0 0.0
  %618 = vmatprep.subr.mxu0 0.0
  %619 = vmatpush2.msra.mxu0 0.0
  %620 = vmatprep.mubr.f32.mxu0 0.0
  %621 = vmatmul.mubr.f32.gmra.mxu0 %v533
  %v622 = vpop.f32.mrf.mxu0
  %v623 = vadd.f32 %v495, %v622
  %v624 = vpop.f32.mrf.mxu0
  %625 = vmatprep.mubr.f32.mxu0 0.0
  %626 = vmatmul.mubr.f32.gmra.mxu0 %v536
  %v627 = vpop.f32.mrf.mxu0
  %v628 = vadd.f32 %v500, %v627
  %v629 = vpop.f32.mrf.mxu0
  %630 = vmatprep.mubr.f32.mxu0 0.0
  %631 = vmatmul.mubr.f32.gmra.mxu0 %v539
  %v632 = vpop.f32.mrf.mxu0
  %v633 = vadd.f32 %v505, %v632
  %v634 = vpop.f32.mrf.mxu0
  %635 = vmatprep.mubr.f32.mxu0 0.0
  %636 = vmatmul.mubr.f32.gmra.mxu0 %v542
  %v637 = vpop.f32.mrf.mxu0
  %v638 = vadd.f32 %v510, %v637
  %v639 = vpop.f32.mrf.mxu0
  %640 = vmatprep.mubr.f32.mxu0 0.0
  %641 = vmatmul.mubr.f32.gmra.mxu0 %v545
  %v642 = vpop.f32.mrf.mxu0
  %v643 = vadd.f32 %v515, %v642
  %v644 = vpop.f32.mrf.mxu0
  %645 = vmatprep.mubr.f32.mxu0 0.0
  %646 = vmatmul.mubr.f32.gmra.mxu0 %v548
  %v647 = vpop.f32.mrf.mxu0
  %v648 = vadd.f32 %v520, %v647
  %v649 = vpop.f32.mrf.mxu0
  %650 = vmatprep.mubr.f32.mxu0 0.0
  %651 = vmatmul.mubr.f32.gmra.mxu0 %v551
  %v652 = vpop.f32.mrf.mxu0
  %v653 = vadd.f32 %v525, %v652
  %v654 = vpop.f32.mrf.mxu0
  %655 = vmatprep.mubr.f32.mxu0 0.0
  %656 = vmatmul.mubr.f32.gmra.mxu0 %v554
  %v657 = vpop.f32.mrf.mxu0
  %v658 = vadd.f32 %v530, %v657
  %v659 = vpop.f32.mrf.mxu0
  %660 = vdwg.mxu0
  %vm661 = vcmp.gt.f32.partialorder %v623, 0.0
  %vm662 = vcmp.gt.f32.partialorder %v628, 0.0
  %vm663 = vcmp.gt.f32.partialorder %v633, 0.0
  %vm664 = vcmp.gt.f32.partialorder %v638, 0.0
  %vm665 = vcmp.gt.f32.partialorder %v643, 0.0
  %vm666 = vcmp.gt.f32.partialorder %v648, 0.0
  %vm667 = vcmp.gt.f32.partialorder %v653, 0.0
  %vm668 = vcmp.gt.f32.partialorder %v658, 0.0
  %v669 = vmul.f32 %v623, 0.01
  %v670 = vmul.f32 %v628, 0.01
  %v671 = vmul.f32 %v633, 0.01
  %v672 = vmul.f32 %v638, 0.01
  %v673 = vmul.f32 %v643, 0.01
  %v674 = vmul.f32 %v648, 0.01
  %v675 = vmul.f32 %v653, 0.01
  %v676 = vmul.f32 %v658, 0.01
  %v677 = vsel %vm661, %v623, %v669
  %v678 = vsel %vm662, %v628, %v670
  %v679 = vsel %vm663, %v633, %v671
  %v680 = vsel %vm664, %v638, %v672
  %v681 = vsel %vm665, %v643, %v673
  %v682 = vsel %vm666, %v648, %v674
  %v683 = vsel %vm667, %v653, %v675
  %v684 = vsel %vm668, %v658, %v676
  %685 = vxpose.xlu0.b32.start [1/16] %v336, 128
  %686 = vxpose.xlu0.b32.cont [2/16] %v337, 128
  %687 = vxpose.xlu0.b32.cont [3/16] 0.0, 128
  %688 = vxpose.xlu0.b32.cont [4/16] 0.0, 128
  %689 = vxpose.xlu0.b32.cont [5/16] 0.0, 128
  %690 = vxpose.xlu0.b32.cont [6/16] 0.0, 128
  %691 = vxpose.xlu0.b32.cont [7/16] 0.0, 128
  %692 = vxpose.xlu0.b32.cont [8/16] 0.0, 128
  %693 = vxpose.xlu0.b32.cont [9/16] 0.0, 128
  %694 = vxpose.xlu0.b32.cont [10/16] 0.0, 128
  %695 = vxpose.xlu0.b32.cont [11/16] 0.0, 128
  %696 = vxpose.xlu0.b32.cont [12/16] 0.0, 128
  %697 = vxpose.xlu0.b32.cont [13/16] 0.0, 128
  %698 = vxpose.xlu0.b32.cont [14/16] 0.0, 128
  %699 = vxpose.xlu0.b32.cont [15/16] 0.0, 128
  %700 = vxpose.xlu0.b32.end [16/16] 0.0, 128
  %v701 = vpop.trf.xlu0
  %v702 = vpop.trf.xlu0
  %v703 = vpop.trf.xlu0
  %v704 = vpop.trf.xlu0
  %v705 = vpop.trf.xlu0
  %v706 = vpop.trf.xlu0
  %v707 = vpop.trf.xlu0
  %v708 = vpop.trf.xlu0
  %v709 = vpop.trf.xlu0
  %v710 = vpop.trf.xlu0
  %v711 = vpop.trf.xlu0
  %v712 = vpop.trf.xlu0
  %v713 = vpop.trf.xlu0
  %v714 = vpop.trf.xlu0
  %v715 = vpop.trf.xlu0
  %v716 = vpop.trf.xlu0
  %717 = vst.msk [vmem:[%s9] sm:$0xff] %vm366, %v701
  %718 = vst.msk [vmem:[%s9 + $0x8] sm:$0xff] %vm366, %v702
  %719 = vst.msk [vmem:[%s9 + $0x10] sm:$0xff] %vm366, %v703
  %720 = vst.msk [vmem:[%s9 + $0x18] sm:$0xff] %vm366, %v704
  %721 = vst.msk [vmem:[%s9 + $0x20] sm:$0xff] %vm366, %v705
  %722 = vst.msk [vmem:[%s9 + $0x28] sm:$0xff] %vm366, %v706
  %723 = vst.msk [vmem:[%s9 + $0x30] sm:$0xff] %vm366, %v707
  %724 = vst.msk [vmem:[%s9 + $0x38] sm:$0xff] %vm366, %v708
  %725 = vst.msk [vmem:[%s9 + $0x40] sm:$0xff] %vm366, %v709
  %726 = vst.msk [vmem:[%s9 + $0x48] sm:$0xff] %vm366, %v710
  %727 = vst.msk [vmem:[%s9 + $0x50] sm:$0xff] %vm366, %v711
  %728 = vst.msk [vmem:[%s9 + $0x58] sm:$0xff] %vm366, %v712
  %729 = vst.msk [vmem:[%s9 + $0x60] sm:$0xff] %vm366, %v713
  %730 = vst.msk [vmem:[%s9 + $0x68] sm:$0xff] %vm366, %v714
  %731 = vst.msk [vmem:[%s9 + $0x70] sm:$0xff] %vm366, %v715
  %732 = vst.msk [vmem:[%s9 + $0x78] sm:$0xff] %vm366, %v716
  %733 = vxpose.xlu0.b32.start [1/16] %v677, 128
  %734 = vxpose.xlu0.b32.cont [2/16] %v678, 128
  %735 = vxpose.xlu0.b32.cont [3/16] %v679, 128
  %736 = vxpose.xlu0.b32.cont [4/16] %v680, 128
  %737 = vxpose.xlu0.b32.cont [5/16] %v681, 128
  %738 = vxpose.xlu0.b32.cont [6/16] %v682, 128
  %739 = vxpose.xlu0.b32.cont [7/16] %v683, 128
  %740 = vxpose.xlu0.b32.cont [8/16] %v684, 128
  %741 = vxpose.xlu0.b32.cont [9/16] 0.0, 128
  %742 = vxpose.xlu0.b32.cont [10/16] 0.0, 128
  %743 = vxpose.xlu0.b32.cont [11/16] 0.0, 128
  %744 = vxpose.xlu0.b32.cont [12/16] 0.0, 128
  %745 = vxpose.xlu0.b32.cont [13/16] 0.0, 128
  %746 = vxpose.xlu0.b32.cont [14/16] 0.0, 128
  %747 = vxpose.xlu0.b32.cont [15/16] 0.0, 128
  %748 = vxpose.xlu0.b32.end [16/16] 0.0, 128
  %v749 = vpop.trf.xlu0
  %v750 = vpop.trf.xlu0
  %v751 = vpop.trf.xlu0
  %v752 = vpop.trf.xlu0
  %v753 = vpop.trf.xlu0
  %v754 = vpop.trf.xlu0
  %v755 = vpop.trf.xlu0
  %v756 = vpop.trf.xlu0
  %v757 = vpop.trf.xlu0
  %v758 = vpop.trf.xlu0
  %v759 = vpop.trf.xlu0
  %v760 = vpop.trf.xlu0
  %v761 = vpop.trf.xlu0
  %v762 = vpop.trf.xlu0
  %v763 = vpop.trf.xlu0
  %v764 = vpop.trf.xlu0
  %765 = vst.msk [vmem:[%s10] sm:$0xff] %vm78, %v749
  %766 = vst.msk [vmem:[%s10 + $0x8] sm:$0xff] %vm78, %v750
  %767 = vst.msk [vmem:[%s10 + $0x10] sm:$0xff] %vm78, %v751
  %768 = vst.msk [vmem:[%s10 + $0x18] sm:$0xff] %vm78, %v752
  %769 = vst.msk [vmem:[%s10 + $0x20] sm:$0xff] %vm78, %v753
  %770 = vst.msk [vmem:[%s10 + $0x28] sm:$0xff] %vm78, %v754
  %771 = vst.msk [vmem:[%s10 + $0x30] sm:$0xff] %vm78, %v755
  %772 = vst.msk [vmem:[%s10 + $0x38] sm:$0xff] %vm78, %v756
  %773 = vst.msk [vmem:[%s10 + $0x40] sm:$0xff] %vm78, %v757
  %774 = vst.msk [vmem:[%s10 + $0x48] sm:$0xff] %vm78, %v758
  %775 = vst.msk [vmem:[%s10 + $0x50] sm:$0xff] %vm78, %v759
  %776 = vst.msk [vmem:[%s10 + $0x58] sm:$0xff] %vm78, %v760
  %777 = vst.msk [vmem:[%s10 + $0x60] sm:$0xff] %vm78, %v761
  %778 = vst.msk [vmem:[%s10 + $0x68] sm:$0xff] %vm78, %v762
  %779 = vst.msk [vmem:[%s10 + $0x70] sm:$0xff] %vm78, %v763
  %780 = vst.msk [vmem:[%s10 + $0x78] sm:$0xff] %vm78, %v764
  // Predicated region
  $region38: #{ae_forward.1} parent=0 // pred_check
    _
  $region39: #{ae_forward.1} parent=0 // pred_check_branch
    %782 = sbr.rel (0) target = $region41
  $region40: #{ae_forward.1} parent=0 // pred_region
    _
  $region41: #{ae_forward.1} parent=0 // pred_fallthru
    _
  // Predicated region
  $region42: #{ae_forward.1} parent=0 // pred_check
    _
  $region43: #{ae_forward.1} parent=0 // pred_check_branch
    %784 = sbr.rel (0) target = $region45
  $region44: #{ae_forward.1} parent=0 // pred_region
    _
  $region45: #{ae_forward.1} parent=0 // pred_fallthru
    _
  // Predicated region
  $region46: #{ae_forward.1} parent=0 // pred_check
    _
  $region47: #{ae_forward.1} parent=0 // pred_check_branch
    %786 = sbr.rel (0) target = $region49
  $region48: #{ae_forward.1} parent=0 // pred_region
    _
  $region49: #{ae_forward.1} parent=0 // pred_fallthru
    _
  // Predicated region
  $region50: #{ae_forward.1} parent=0 // pred_check
    _
  $region51: #{ae_forward.1} parent=0 // pred_check_branch
    %788 = sbr.rel (0) target = $region53
  $region52: #{ae_forward.1} parent=0 // pred_region
    _
  $region53: #{ae_forward.1} parent=0 // pred_fallthru
    _

</llo_original>
